<compile_context>
chip_gen: v5e
topology: v5e:2x2
jax: 0.10.0
libtpu: 0.0.40
codegen_flags: <defaults>
</compile_context>

<pallas_src>
import jax
import jax.numpy as jnp
from jax import lax
from jax.experimental import pallas as pl
from jax.experimental.pallas import tpu as pltpu

KH = KW = 3  # 3x3 conv, stride=1, padding=1


def conv_matmul_kernel(col_ref, w_ref, b_ref, o_ref):
    """One M-tile per grid step.

    col_ref: (TM, K)     im2col patch rows (VMEM)
    w_ref  : (K, Cout)   stationary conv weight
    b_ref  : (1, Cout)   bias + (other1+other2+other3)
    o_ref  : (TM, Cout)  output tile
    """
    acc = jnp.dot(col_ref[...], w_ref[...],
                  preferred_element_type=jnp.float32)      # (TM, Cout)
    o_ref[...] = (acc + b_ref[...]).astype(o_ref.dtype)


def model_forward(x_nchw, weight, bias, other1=1, other2=2, other3=3):
    """x_nchw: (N, Cin, H, W) f32; weight: (Cout, Cin, KH, KW); bias: (Cout,)"""
    N, Cin, H, W = x_nchw.shape
    Cout = weight.shape[0]
    K = KH * KW * Cin
    M = N * H * W
    add_const = float(other1 + other2 + other3)

    # --- im2col in the wrapper: one fused XLA pass, lane-dense (M, K) slab ---
    x_nhwc = jnp.transpose(x_nchw, (0, 2, 3, 1))                 # (N, H, W, Cin)
    x_pad = jnp.pad(x_nhwc, ((0, 0), (1, 1), (1, 1), (0, 0)))    # (N, H+2, W+2, Cin)
    taps = [x_pad[:, dy:dy + H, dx:dx + W, :]                    # 9 x (N, H, W, Cin)
            for dy in range(KH) for dx in range(KW)]
    col = jnp.concatenate(taps, axis=-1).reshape(M, K)           # (M, K)

    # Weight: (Cout, Cin, KH, KW) -> (Cout, KH, KW, Cin) -> (K, Cout); the K
    # ordering (tap = dy*KW+dx, then channel) matches the concat above.
    w_t = jnp.transpose(weight, (0, 2, 3, 1)).reshape(Cout, K).T.astype(jnp.float32)
    # Pre-fold the scalar adds into the bias; (1, Cout) broadcasts over rows.
    b_row = (bias + add_const).reshape(1, Cout).astype(jnp.float32)

    # 2-way split of M keeps both v7x TensorCores busy; ~free on v5e/v6e.
    grid_m = 2 if (M % 16 == 0) else 1
    TM = M // grid_m

    out_flat = pl.pallas_call(
        conv_matmul_kernel,
        out_shape=jax.ShapeDtypeStruct((M, Cout), jnp.float32),
        grid=(grid_m,),
        in_specs=[
            pl.BlockSpec((TM, K), lambda i: (i, 0)),
            pl.BlockSpec((K, Cout), lambda i: (0, 0)),   # grid-invariant
            pl.BlockSpec((1, Cout), lambda i: (0, 0)),   # grid-invariant
        ],
        out_specs=pl.BlockSpec((TM, Cout), lambda i: (i, 0)),
        compiler_params=pltpu.CompilerParams(
            dimension_semantics=("parallel",)),
        cost_estimate=pl.CostEstimate(
            flops=2 * M * K * Cout,
            transcendentals=0,
            bytes_accessed=4 * (M * K + K * Cout + Cout + M * Cout)),
    )(col, w_t, b_row)

    # (M, Cout) -> (N, H, W, Cout) -> (N, Cout, H, W): tiny wrapper transpose.
    return jnp.transpose(out_flat.reshape(N, H, W, Cout), (0, 3, 1, 2))


def reference_forward(x_nchw, weight, bias, add_const=6.0):
    out = lax.conv_general_dilated(
        x_nchw, weight, window_strides=(1, 1), padding=((1, 1), (1, 1)),
        dimension_numbers=("NCHW", "OIHW", "NCHW"))
    return out + bias[None, :, None, None] + add_const


if __name__ == "__main__":
    key = jax.random.PRNGKey(0)
    k_x, k_w, k_b = jax.random.split(key, 3)

    # Small shapes consistent with the module: channels fixed 64 -> 9.
    N, Cin, H, W, Cout = 2, 64, 16, 16, 9

    x1 = jax.random.normal(k_x, (N, Cin, H, W), dtype=jnp.float32)
    # Deterministic synthetic Conv2d(64, 9, 3) parameters.
    fan_in = Cin * KH * KW
    bound = 1.0 / jnp.sqrt(fan_in)
    weight = jax.random.uniform(k_w, (Cout, Cin, KH, KW), jnp.float32,
                                -bound, bound)
    bias = jax.random.uniform(k_b, (Cout,), jnp.float32, -bound, bound)

    out = model_forward(x1, weight, bias, other1=1, other2=2, other3=3)
    out = jax.block_until_ready(out)

    ref = jax.block_until_ready(reference_forward(x1, weight, bias, 6.0))
    assert out.shape == (N, Cout, H, W), out.shape
    assert jnp.allclose(out, ref, atol=1e-4, rtol=1e-4), \
        float(jnp.max(jnp.abs(out - ref)))

    print("KERNEL_OK")
</pallas_src>

<mosaic_0001>
module attributes {stable_mosaic.version = 11 : i64} {
  func.func @conv_matmul_kernel(%arg0: i32, %arg1: memref<256x576xf32, #tpu.memory_space<vmem>>, %arg2: memref<576x9xf32, #tpu.memory_space<vmem>>, %arg3: memref<1x9xf32, #tpu.memory_space<vmem>>, %arg4: memref<256x9xf32, #tpu.memory_space<vmem>>) attributes {dimension_semantics = [#tpu.dimension_semantics<parallel>], iteration_bounds = array<i64: 2>, scalar_prefetch = 0 : i64, scratch_operands = 0 : i64, tpu.core_type = #tpu.core_type<tc>, window_params = [{transform_indices = @transform_0, window_bounds = array<i64: 256, 576>}, {pipeline_mode = #tpu.pipeline_mode<synchronous>, transform_indices = @transform_1, window_bounds = array<i64: 576, 9>}, {pipeline_mode = #tpu.pipeline_mode<synchronous>, transform_indices = @transform_2, window_bounds = array<i64: 1, 9>}, {transform_indices = @transform_3, window_bounds = array<i64: 256, 9>}]} {
    %c0 = arith.constant 0 : index
    %c0_0 = arith.constant 0 : index
    %0 = vector.load %arg1[%c0, %c0_0] : memref<256x576xf32, #tpu.memory_space<vmem>>, vector<256x576xf32>
    %c0_1 = arith.constant 0 : index
    %c0_2 = arith.constant 0 : index
    %1 = vector.load %arg2[%c0_1, %c0_2] : memref<576x9xf32, #tpu.memory_space<vmem>>, vector<576x9xf32>
    %cst = arith.constant dense<0.000000e+00> : vector<256x9xf32>
    %2 = tpu.matmul %0, %1, %cst {dimension_numbers = #tpu.dot_dimension_numbers<[1], [0], [0], [1], [0, 0, 1, 1], [], []>} : vector<256x576xf32>, vector<576x9xf32>, vector<256x9xf32> -> vector<256x9xf32>
    %c0_3 = arith.constant 0 : index
    %c0_4 = arith.constant 0 : index
    %3 = vector.load %arg3[%c0_3, %c0_4] : memref<1x9xf32, #tpu.memory_space<vmem>>, vector<1x9xf32>
    %4 = vector.broadcast %3 : vector<1x9xf32> to vector<256x9xf32>
    %5 = arith.addf %2, %4 : vector<256x9xf32>
    %c0_5 = arith.constant 0 : index
    %c0_6 = arith.constant 0 : index
    %6 = vector.load %arg4[%c0_5, %c0_6] : memref<256x9xf32, #tpu.memory_space<vmem>>, vector<256x9xf32>
    tpu.vector_store %arg4[%c0_5, %c0_6], %5 {strides = array<i32>} : memref<256x9xf32, #tpu.memory_space<vmem>>, vector<256x9xf32>,
    return
  }
  func.func @transform_0(%arg0: i32) -> (i32, i32) {
    %c0_i32 = arith.constant 0 : i32
    %c0_i32_0 = arith.constant 0 : i32
    return %arg0, %c0_i32 : i32, i32
  }
  func.func @transform_1(%arg0: i32) -> (i32, i32) {
    %c0_i32 = arith.constant 0 : i32
    %c0_i32_0 = arith.constant 0 : i32
    %c0_i32_1 = arith.constant 0 : i32
    return %c0_i32, %c0_i32_0 : i32, i32
  }
  func.func @transform_2(%arg0: i32) -> (i32, i32) {
    %c0_i32 = arith.constant 0 : i32
    %c0_i32_0 = arith.constant 0 : i32
    %c0_i32_1 = arith.constant 0 : i32
    return %c0_i32, %c0_i32_0 : i32, i32
  }
  func.func @transform_3(%arg0: i32) -> (i32, i32) {
    %c0_i32 = arith.constant 0 : i32
    %c0_i32_0 = arith.constant 0 : i32
    return %arg0, %c0_i32 : i32, i32
  }
}

</mosaic_0001>

<llo_original>
// kernel: tpu_custom_call.1
$region0: #{tpu_custom_call.1}
  #allocation0 [shape = 'u32[]', space=smem, size = 0x4, offset = 0x4, fixed_abs, tag = 'smem constant byte address 0x4 - core index']
  #allocation1 [shape = 'u32[72,128]{1,0:T(1,128)}', space=vmem, size = 0x9000, scoped, tag = 'internal scratch']
  %s0 = inlined_call_operand.vmem [shape: f32[512,576], index: 0, kind: input, shape index: {}]
  %s1 = inlined_call_operand.vmem [shape: f32[576,9], index: 1, kind: input, shape index: {}]
  %s2 = inlined_call_operand.vmem [shape: f32[1,9], index: 2, kind: input, shape index: {}]
  %s3 = inlined_call_operand.vmem [shape: f32[512,9], index: 3, kind: output, shape index: {}]
  %s4 = sld [smem:[#allocation0]]
  $region45: #{tpu_custom_call.1} parent=0
    _
  %s6 = ssub.s32 1, %s4
  %s7 = scalar_select 0, %s6, %s4
  loop: start=0, step=1, limit=4
  $region2: #{tpu_custom_call.1} parent=0 // loop_pre_header
    _
  $region3: #{tpu_custom_call.1} parent=0 // loop_header
    %s9 = sphi 0, %s13
    %p10 = scmp.ge.s32.totalorder %s9, 4
    %s19 = sphi 0, %s21
    %s22 = sphi 0, %s19
    %s23 = sphi 0, %s22
    %s39 = sphi 0, %s23
    %s43 = sphi 0, %s43
    %s45 = sphi 0, %s43
    %s46 = sphi 0, %s45
    %s60 = sphi 0, %s46
    %s64 = sphi 0, %s64
    %s66 = sphi 0, %s64
    %s67 = sphi 0, %s66
    %s81 = sphi 0, %s67
    %s87 = sphi 0, %s89
    %s90 = sphi 0, %s87
    %s91 = sphi 0, %s90
    %s107 = sphi 0, %s91
  $region4: #{tpu_custom_call.1} parent=0 // loop_header_branch
    %12 = sbr.rel (%p10) target = $region8
  $region5: #{tpu_custom_call.1} parent=0 // loop_body
    %s14 = ssub.s32 %s9, 1
    %s15 = ssub.s32 %s9, 2
    %s16 = sadd.s32 %s9, 1
    %s17 = ssub.s32 %s9, %s16
    %p18 = scmp.eq.s32.totalorder %s17, 0
    %s20 = sadd.s32 %s19, 1
    %s21 = scalar_select %p18, %s19, %s20
    %p24 = pneg %p18
    %p25 = scmp.eq.s32.totalorder %s9, 1
    %p26 = por %p24, %p25
    %p27 = scmp.ne.s32.totalorder %s19, %s22
    %p28 = scmp.eq.s32.totalorder %s9, 0
    %p29 = por %p27, %p28
    %p30 = scmp.ne.s32.totalorder %s19, %s22
    %p31 = scmp.eq.s32.totalorder %s14, 1
    %p32 = por %p30, %p31
    %p33 = scmp.ne.s32.totalorder %s22, %s23
    %p34 = scmp.eq.s32.totalorder %s14, 0
    %p35 = por %p33, %p34
    %p36 = scmp.ne.s32.totalorder %s22, %s23
    %p37 = scmp.eq.s32.totalorder %s15, 1
    %p38 = por %p36, %p37
    %p40 = scmp.ne.s32.totalorder %s23, %s39
    %p41 = scmp.eq.s32.totalorder %s15, 0
    %p42 = por %p40, %p41
    %s44 = sadd.s32 %s43, 1
    %p47 = scmp.eq.s32.totalorder %s9, 1
    %p48 = scmp.ne.s32.totalorder %s43, %s45
    %p49 = scmp.eq.s32.totalorder %s9, 0
    %p50 = por %p48, %p49
    %p51 = scmp.ne.s32.totalorder %s43, %s45
    %p52 = scmp.eq.s32.totalorder %s14, 1
    %p53 = por %p51, %p52
    %p54 = scmp.ne.s32.totalorder %s45, %s46
    %p55 = scmp.eq.s32.totalorder %s14, 0
    %p56 = por %p54, %p55
    %p57 = scmp.ne.s32.totalorder %s45, %s46
    %p58 = scmp.eq.s32.totalorder %s15, 1
    %p59 = por %p57, %p58
    %p61 = scmp.ne.s32.totalorder %s46, %s60
    %p62 = scmp.eq.s32.totalorder %s15, 0
    %p63 = por %p61, %p62
    %s65 = sadd.s32 %s64, 1
    %p68 = scmp.eq.s32.totalorder %s9, 1
    %p69 = scmp.ne.s32.totalorder %s64, %s66
    %p70 = scmp.eq.s32.totalorder %s9, 0
    %p71 = por %p69, %p70
    %p72 = scmp.ne.s32.totalorder %s64, %s66
    %p73 = scmp.eq.s32.totalorder %s14, 1
    %p74 = por %p72, %p73
    %p75 = scmp.ne.s32.totalorder %s66, %s67
    %p76 = scmp.eq.s32.totalorder %s14, 0
    %p77 = por %p75, %p76
    %p78 = scmp.ne.s32.totalorder %s66, %s67
    %p79 = scmp.eq.s32.totalorder %s15, 1
    %p80 = por %p78, %p79
    %p82 = scmp.ne.s32.totalorder %s67, %s81
    %p83 = scmp.eq.s32.totalorder %s15, 0
    %p84 = por %p82, %p83
    %s85 = ssub.s32 %s9, %s16
    %p86 = scmp.eq.s32.totalorder %s85, 0
    %s88 = sadd.s32 %s87, 1
    %s89 = scalar_select %p86, %s87, %s88
    %p92 = pneg %p86
    %p93 = scmp.eq.s32.totalorder %s9, 1
    %p94 = por %p92, %p93
    %p95 = scmp.ne.s32.totalorder %s87, %s90
    %p96 = scmp.eq.s32.totalorder %s9, 0
    %p97 = por %p95, %p96
    %p98 = scmp.ne.s32.totalorder %s87, %s90
    %p99 = scmp.eq.s32.totalorder %s14, 1
    %p100 = por %p98, %p99
    %p101 = scmp.ne.s32.totalorder %s90, %s91
    %p102 = scmp.eq.s32.totalorder %s14, 0
    %p103 = por %p101, %p102
    %p104 = scmp.ne.s32.totalorder %s90, %s91
    %p105 = scmp.eq.s32.totalorder %s15, 1
    %p106 = por %p104, %p105
    %p108 = scmp.ne.s32.totalorder %s91, %s107
    %p109 = scmp.eq.s32.totalorder %s15, 0
    %p110 = por %p108, %p109
    %p111 = scmp.le.s32.totalorder 1, %s9
    %p112 = scmp.lt.s32.totalorder %s9, 3
    %p113 = pnand %p111, %p112
    %p114 = pneg %p113
    // Predicated region
    $region9: #{tpu_custom_call.1} parent=5 // pred_check
      _
    $region10: #{tpu_custom_call.1} parent=5 // pred_check_branch
      %116 = sbr.rel (%p113) target = $region12
    $region11: #{tpu_custom_call.1} parent=5 // pred_region
      %s117 = ssub.s32 %s9, 1
      // Predicated region
      $region13: #{tpu_custom_call.1} parent=11 // pred_check
        %p118 = pneg %p56
      $region14: #{tpu_custom_call.1} parent=11 // pred_check_branch
        %120 = sbr.rel (%p118) target = $region16
      $region15: #{tpu_custom_call.1} parent=11 // pred_region
        _
      $region16: #{tpu_custom_call.1} parent=11 // pred_fallthru
        _
      // Predicated region
      $region17: #{tpu_custom_call.1} parent=11 // pred_check
        %p121 = pneg %p77
      $region18: #{tpu_custom_call.1} parent=11 // pred_check_branch
        %123 = sbr.rel (%p121) target = $region20
      $region19: #{tpu_custom_call.1} parent=11 // pred_region
        _
      $region20: #{tpu_custom_call.1} parent=11 // pred_fallthru
        _
    $region12: #{tpu_custom_call.1} parent=5 // pred_fallthru
      _
    %p124 = scmp.lt.s32.totalorder %s9, 2
    // Predicated region
    $region21: #{tpu_custom_call.1} parent=5 // pred_check
      %p125 = pneg %p124
    $region22: #{tpu_custom_call.1} parent=5 // pred_check_branch
      %127 = sbr.rel (%p125) target = $region24
    $region23: #{tpu_custom_call.1} parent=5 // pred_region
      // Predicated region
      $region25: #{tpu_custom_call.1} parent=23 // pred_check
        %p128 = pneg %p29
      $region26: #{tpu_custom_call.1} parent=23 // pred_check_branch
        %130 = sbr.rel (%p128) target = $region28
      $region27: #{tpu_custom_call.1} parent=23 // pred_region
        %s131 = smul.u32 32, %s9
        %p132 = scmp.lt.s32.totalorder %s131, 63
        %s133 = scalar_select %p132, %s131, 63
        %s134 = smul.addr %s133, 5
        %s135 = smul.addr %s134, 8
        %s136 = scalar_lea.vmem %s0, %s135
        %s137 = smul.u32 32, %s9
      $region28: #{tpu_custom_call.1} parent=23 // pred_fallthru
        _
    $region24: #{tpu_custom_call.1} parent=5 // pred_fallthru
      _
    %p138 = scmp.le.s32.totalorder 1, %s9
    %p139 = scmp.lt.s32.totalorder %s9, 3
    %p140 = pnand %p138, %p139
    %p141 = pneg %p140
    // Predicated region
    $region29: #{tpu_custom_call.1} parent=5 // pred_check
      _
    $region30: #{tpu_custom_call.1} parent=5 // pred_check_branch
      %143 = sbr.rel (%p140) target = $region32
    $region31: #{tpu_custom_call.1} parent=5 // pred_region
      %s144 = ssub.s32 %s9, 1
      %s145 = smul.u32 32, %s14
      %p146 = scmp.lt.s32.totalorder %s145, 63
      %s147 = scalar_select %p146, %s145, 63
      %s148 = smul.addr %s147, 5
      %s149 = smul.addr %s148, 8
      %s150 = scalar_lea.vmem %s0, %s149
      %p151 = pneg %p35
      %p152 = pneg %p32
      %p153 = pneg %p56
      %p154 = pneg %p53
      %p155 = pneg %p77
      %p156 = pneg %p74
      %p157 = pneg %p103
      %p158 = pneg %p100
      %s159 = smul.u32 32, %s14
      %p160 = scmp.lt.s32.totalorder %s159, 63
      %s161 = scalar_select %p160, %s159, 63
      %s162 = smul.addr %s161, 8
      %s163 = scalar_lea.vmem %s3, %s162
      %s164 = smul.u32 32, %s14
      %p165 = scmp.lt.s32.totalorder %s164, 63
      %s166 = scalar_select %p165, %s164, 63
      %s167 = smul.addr %s166, 5
      %s168 = smul.addr %s167, 8
      %s169 = scalar_lea.vmem %s0, %s168
      %s170 = smul.u32 32, %s14
      %s171 = smul.u32 32, %s14
      %p172 = scmp.lt.s32.totalorder %s171, 63
      %s173 = scalar_select %p172, %s171, 63
      %s174 = smul.addr %s173, 8
      %s175 = scalar_lea.vmem %s3, %s174
      %s176 = smul.u32 32, %s14
      %v177 = vld [vmem:[%s169] sm:$0xff]
      %v178 = vld [vmem:[%s169 + $0x8] sm:$0xff]
      %v179 = vld [vmem:[%s169 + $0x10] sm:$0xff]
      %v180 = vld [vmem:[%s169 + $0x18] sm:$0xff]
      %v181 = vld [vmem:[%s169 + $0x20] sm:$0xff]
      %v182 = vld [vmem:[%s169 + $0x28] sm:$0xff]
      %v183 = vld [vmem:[%s169 + $0x30] sm:$0xff]
      %v184 = vld [vmem:[%s169 + $0x38] sm:$0xff]
      %v185 = vld [vmem:[%s169 + $0x40] sm:$0xff]
      %v186 = vld [vmem:[%s169 + $0x48] sm:$0xff]
      %v187 = vld [vmem:[%s169 + $0x50] sm:$0xff]
      %v188 = vld [vmem:[%s169 + $0x58] sm:$0xff]
      %v189 = vld [vmem:[%s169 + $0x60] sm:$0xff]
      %v190 = vld [vmem:[%s169 + $0x68] sm:$0xff]
      %v191 = vld [vmem:[%s169 + $0x70] sm:$0xff]
      %v192 = vld [vmem:[%s169 + $0x78] sm:$0xff]
      %v193 = vld [vmem:[%s169 + $0x80] sm:$0xff]
      %v194 = vld [vmem:[%s169 + $0x88] sm:$0xff]
      %v195 = vld [vmem:[%s169 + $0x90] sm:$0xff]
      %v196 = vld [vmem:[%s169 + $0x98] sm:$0xff]
      %v197 = vld [vmem:[%s169 + $0xa0] sm:$0xff]
      %v198 = vld [vmem:[%s169 + $0xa8] sm:$0xff]
      %v199 = vld [vmem:[%s169 + $0xb0] sm:$0xff]
      %v200 = vld [vmem:[%s169 + $0xb8] sm:$0xff]
      %v201 = vld [vmem:[%s169 + $0xc0] sm:$0xff]
      %v202 = vld [vmem:[%s169 + $0xc8] sm:$0xff]
      %v203 = vld [vmem:[%s169 + $0xd0] sm:$0xff]
      %v204 = vld [vmem:[%s169 + $0xd8] sm:$0xff]
      %v205 = vld [vmem:[%s169 + $0xe0] sm:$0xff]
      %v206 = vld [vmem:[%s169 + $0xe8] sm:$0xff]
      %v207 = vld [vmem:[%s169 + $0xf0] sm:$0xff]
      %v208 = vld [vmem:[%s169 + $0xf8] sm:$0xff]
      %v209 = vld [vmem:[%s169 + $0x100] sm:$0xff]
      %v210 = vld [vmem:[%s169 + $0x108] sm:$0xff]
      %v211 = vld [vmem:[%s169 + $0x110] sm:$0xff]
      %v212 = vld [vmem:[%s169 + $0x118] sm:$0xff]
      %v213 = vld [vmem:[%s169 + $0x120] sm:$0xff]
      %v214 = vld [vmem:[%s169 + $0x128] sm:$0xff]
      %v215 = vld [vmem:[%s169 + $0x130] sm:$0xff]
      %v216 = vld [vmem:[%s169 + $0x138] sm:$0xff]
      %v217 = vld [vmem:[%s169 + $0x140] sm:$0xff]
      %v218 = vld [vmem:[%s169 + $0x148] sm:$0xff]
      %v219 = vld [vmem:[%s169 + $0x150] sm:$0xff]
      %v220 = vld [vmem:[%s169 + $0x158] sm:$0xff]
      %v221 = vld [vmem:[%s169 + $0x160] sm:$0xff]
      %v222 = vld [vmem:[%s169 + $0x168] sm:$0xff]
      %v223 = vld [vmem:[%s169 + $0x170] sm:$0xff]
      %v224 = vld [vmem:[%s169 + $0x178] sm:$0xff]
      %v225 = vld [vmem:[%s169 + $0x180] sm:$0xff]
      %v226 = vld [vmem:[%s169 + $0x188] sm:$0xff]
      %v227 = vld [vmem:[%s169 + $0x190] sm:$0xff]
      %v228 = vld [vmem:[%s169 + $0x198] sm:$0xff]
      %v229 = vld [vmem:[%s169 + $0x1a0] sm:$0xff]
      %v230 = vld [vmem:[%s169 + $0x1a8] sm:$0xff]
      %v231 = vld [vmem:[%s169 + $0x1b0] sm:$0xff]
      %v232 = vld [vmem:[%s169 + $0x1b8] sm:$0xff]
      %v233 = vld [vmem:[%s169 + $0x1c0] sm:$0xff]
      %v234 = vld [vmem:[%s169 + $0x1c8] sm:$0xff]
      %v235 = vld [vmem:[%s169 + $0x1d0] sm:$0xff]
      %v236 = vld [vmem:[%s169 + $0x1d8] sm:$0xff]
      %v237 = vld [vmem:[%s169 + $0x1e0] sm:$0xff]
      %v238 = vld [vmem:[%s169 + $0x1e8] sm:$0xff]
      %v239 = vld [vmem:[%s169 + $0x1f0] sm:$0xff]
      %v240 = vld [vmem:[%s169 + $0x1f8] sm:$0xff]
      %v241 = vld [vmem:[%s169 + $0x200] sm:$0xff]
      %v242 = vld [vmem:[%s169 + $0x208] sm:$0xff]
      %v243 = vld [vmem:[%s169 + $0x210] sm:$0xff]
      %v244 = vld [vmem:[%s169 + $0x218] sm:$0xff]
      %v245 = vld [vmem:[%s169 + $0x220] sm:$0xff]
      %v246 = vld [vmem:[%s169 + $0x228] sm:$0xff]
      %v247 = vld [vmem:[%s169 + $0x230] sm:$0xff]
      %v248 = vld [vmem:[%s169 + $0x238] sm:$0xff]
      %v249 = vld [vmem:[%s169 + $0x240] sm:$0xff]
      %v250 = vld [vmem:[%s169 + $0x248] sm:$0xff]
      %v251 = vld [vmem:[%s169 + $0x250] sm:$0xff]
      %v252 = vld [vmem:[%s169 + $0x258] sm:$0xff]
      %v253 = vld [vmem:[%s169 + $0x260] sm:$0xff]
      %v254 = vld [vmem:[%s169 + $0x268] sm:$0xff]
      %v255 = vld [vmem:[%s169 + $0x270] sm:$0xff]
      %v256 = vld [vmem:[%s169 + $0x278] sm:$0xff]
      %v257 = vld [vmem:[%s169 + $0x280] sm:$0xff]
      %v258 = vld [vmem:[%s169 + $0x288] sm:$0xff]
      %v259 = vld [vmem:[%s169 + $0x290] sm:$0xff]
      %v260 = vld [vmem:[%s169 + $0x298] sm:$0xff]
      %v261 = vld [vmem:[%s169 + $0x2a0] sm:$0xff]
      %v262 = vld [vmem:[%s169 + $0x2a8] sm:$0xff]
      %v263 = vld [vmem:[%s169 + $0x2b0] sm:$0xff]
      %v264 = vld [vmem:[%s169 + $0x2b8] sm:$0xff]
      %v265 = vld [vmem:[%s169 + $0x2c0] sm:$0xff]
      %v266 = vld [vmem:[%s169 + $0x2c8] sm:$0xff]
      %v267 = vld [vmem:[%s169 + $0x2d0] sm:$0xff]
      %v268 = vld [vmem:[%s169 + $0x2d8] sm:$0xff]
      %v269 = vld [vmem:[%s169 + $0x2e0] sm:$0xff]
      %v270 = vld [vmem:[%s169 + $0x2e8] sm:$0xff]
      %v271 = vld [vmem:[%s169 + $0x2f0] sm:$0xff]
      %v272 = vld [vmem:[%s169 + $0x2f8] sm:$0xff]
      %v273 = vld [vmem:[%s169 + $0x300] sm:$0xff]
      %v274 = vld [vmem:[%s169 + $0x308] sm:$0xff]
      %v275 = vld [vmem:[%s169 + $0x310] sm:$0xff]
      %v276 = vld [vmem:[%s169 + $0x318] sm:$0xff]
      %v277 = vld [vmem:[%s169 + $0x320] sm:$0xff]
      %v278 = vld [vmem:[%s169 + $0x328] sm:$0xff]
      %v279 = vld [vmem:[%s169 + $0x330] sm:$0xff]
      %v280 = vld [vmem:[%s169 + $0x338] sm:$0xff]
      %v281 = vld [vmem:[%s169 + $0x340] sm:$0xff]
      %v282 = vld [vmem:[%s169 + $0x348] sm:$0xff]
      %v283 = vld [vmem:[%s169 + $0x350] sm:$0xff]
      %v284 = vld [vmem:[%s169 + $0x358] sm:$0xff]
      %v285 = vld [vmem:[%s169 + $0x360] sm:$0xff]
      %v286 = vld [vmem:[%s169 + $0x368] sm:$0xff]
      %v287 = vld [vmem:[%s169 + $0x370] sm:$0xff]
      %v288 = vld [vmem:[%s169 + $0x378] sm:$0xff]
      %v289 = vld [vmem:[%s169 + $0x380] sm:$0xff]
      %v290 = vld [vmem:[%s169 + $0x388] sm:$0xff]
      %v291 = vld [vmem:[%s169 + $0x390] sm:$0xff]
      %v292 = vld [vmem:[%s169 + $0x398] sm:$0xff]
      %v293 = vld [vmem:[%s169 + $0x3a0] sm:$0xff]
      %v294 = vld [vmem:[%s169 + $0x3a8] sm:$0xff]
      %v295 = vld [vmem:[%s169 + $0x3b0] sm:$0xff]
      %v296 = vld [vmem:[%s169 + $0x3b8] sm:$0xff]
      %v297 = vld [vmem:[%s169 + $0x3c0] sm:$0xff]
      %v298 = vld [vmem:[%s169 + $0x3c8] sm:$0xff]
      %v299 = vld [vmem:[%s169 + $0x3d0] sm:$0xff]
      %v300 = vld [vmem:[%s169 + $0x3d8] sm:$0xff]
      %v301 = vld [vmem:[%s169 + $0x3e0] sm:$0xff]
      %v302 = vld [vmem:[%s169 + $0x3e8] sm:$0xff]
      %v303 = vld [vmem:[%s169 + $0x3f0] sm:$0xff]
      %v304 = vld [vmem:[%s169 + $0x3f8] sm:$0xff]
      %v305 = vld [vmem:[%s169 + $0x400] sm:$0xff]
      %v306 = vld [vmem:[%s169 + $0x408] sm:$0xff]
      %v307 = vld [vmem:[%s169 + $0x410] sm:$0xff]
      %v308 = vld [vmem:[%s169 + $0x418] sm:$0xff]
      %v309 = vld [vmem:[%s169 + $0x420] sm:$0xff]
      %v310 = vld [vmem:[%s169 + $0x428] sm:$0xff]
      %v311 = vld [vmem:[%s169 + $0x430] sm:$0xff]
      %v312 = vld [vmem:[%s169 + $0x438] sm:$0xff]
      %v313 = vld [vmem:[%s169 + $0x440] sm:$0xff]
      %v314 = vld [vmem:[%s169 + $0x448] sm:$0xff]
      %v315 = vld [vmem:[%s169 + $0x450] sm:$0xff]
      %v316 = vld [vmem:[%s169 + $0x458] sm:$0xff]
      %v317 = vld [vmem:[%s169 + $0x460] sm:$0xff]
      %v318 = vld [vmem:[%s169 + $0x468] sm:$0xff]
      %v319 = vld [vmem:[%s169 + $0x470] sm:$0xff]
      %v320 = vld [vmem:[%s169 + $0x478] sm:$0xff]
      %v321 = vld [vmem:[%s169 + $0x480] sm:$0xff]
      %v322 = vld [vmem:[%s169 + $0x488] sm:$0xff]
      %v323 = vld [vmem:[%s169 + $0x490] sm:$0xff]
      %v324 = vld [vmem:[%s169 + $0x498] sm:$0xff]
      %v325 = vld [vmem:[%s169 + $0x4a0] sm:$0xff]
      %v326 = vld [vmem:[%s169 + $0x4a8] sm:$0xff]
      %v327 = vld [vmem:[%s169 + $0x4b0] sm:$0xff]
      %v328 = vld [vmem:[%s169 + $0x4b8] sm:$0xff]
      %v329 = vld [vmem:[%s169 + $0x4c0] sm:$0xff]
      %v330 = vld [vmem:[%s169 + $0x4c8] sm:$0xff]
      %v331 = vld [vmem:[%s169 + $0x4d0] sm:$0xff]
      %v332 = vld [vmem:[%s169 + $0x4d8] sm:$0xff]
      %v333 = vld [vmem:[%s169 + $0x4e0] sm:$0xff]
      %v334 = vld [vmem:[%s169 + $0x4e8] sm:$0xff]
      %v335 = vld [vmem:[%s169 + $0x4f0] sm:$0xff]
      %v336 = vld [vmem:[%s169 + $0x4f8] sm:$0xff]
      %v337 = vld [vmem:[%s1] sm:$0xff]
      %v338 = vld [vmem:[%s1 + $0x8] sm:$0xff]
      %v339 = vld [vmem:[%s1 + $0x10] sm:$0xff]
      %v340 = vld [vmem:[%s1 + $0x18] sm:$0xff]
      %v341 = vld [vmem:[%s1 + $0x20] sm:$0xff]
      %v342 = vld [vmem:[%s1 + $0x28] sm:$0xff]
      %v343 = vld [vmem:[%s1 + $0x30] sm:$0xff]
      %v344 = vld [vmem:[%s1 + $0x38] sm:$0xff]
      %v345 = vld [vmem:[%s1 + $0x40] sm:$0xff]
      %v346 = vld [vmem:[%s1 + $0x48] sm:$0xff]
      %v347 = vld [vmem:[%s1 + $0x50] sm:$0xff]
      %v348 = vld [vmem:[%s1 + $0x58] sm:$0xff]
      %v349 = vld [vmem:[%s1 + $0x60] sm:$0xff]
      %v350 = vld [vmem:[%s1 + $0x68] sm:$0xff]
      %v351 = vld [vmem:[%s1 + $0x70] sm:$0xff]
      %v352 = vld [vmem:[%s1 + $0x78] sm:$0xff]
      %v353 = vld [vmem:[%s1 + $0x80] sm:$0xff]
      %v354 = vld [vmem:[%s1 + $0x88] sm:$0xff]
      %v355 = vld [vmem:[%s1 + $0x90] sm:$0xff]
      %v356 = vld [vmem:[%s1 + $0x98] sm:$0xff]
      %v357 = vld [vmem:[%s1 + $0xa0] sm:$0xff]
      %v358 = vld [vmem:[%s1 + $0xa8] sm:$0xff]
      %v359 = vld [vmem:[%s1 + $0xb0] sm:$0xff]
      %v360 = vld [vmem:[%s1 + $0xb8] sm:$0xff]
      %v361 = vld [vmem:[%s1 + $0xc0] sm:$0xff]
      %v362 = vld [vmem:[%s1 + $0xc8] sm:$0xff]
      %v363 = vld [vmem:[%s1 + $0xd0] sm:$0xff]
      %v364 = vld [vmem:[%s1 + $0xd8] sm:$0xff]
      %v365 = vld [vmem:[%s1 + $0xe0] sm:$0xff]
      %v366 = vld [vmem:[%s1 + $0xe8] sm:$0xff]
      %v367 = vld [vmem:[%s1 + $0xf0] sm:$0xff]
      %v368 = vld [vmem:[%s1 + $0xf8] sm:$0xff]
      %v369 = vld [vmem:[%s1 + $0x100] sm:$0xff]
      %v370 = vld [vmem:[%s1 + $0x108] sm:$0xff]
      %v371 = vld [vmem:[%s1 + $0x110] sm:$0xff]
      %v372 = vld [vmem:[%s1 + $0x118] sm:$0xff]
      %v373 = vld [vmem:[%s1 + $0x120] sm:$0xff]
      %v374 = vld [vmem:[%s1 + $0x128] sm:$0xff]
      %v375 = vld [vmem:[%s1 + $0x130] sm:$0xff]
      %v376 = vld [vmem:[%s1 + $0x138] sm:$0xff]
      %v377 = vld [vmem:[%s1 + $0x140] sm:$0xff]
      %v378 = vld [vmem:[%s1 + $0x148] sm:$0xff]
      %v379 = vld [vmem:[%s1 + $0x150] sm:$0xff]
      %v380 = vld [vmem:[%s1 + $0x158] sm:$0xff]
      %v381 = vld [vmem:[%s1 + $0x160] sm:$0xff]
      %v382 = vld [vmem:[%s1 + $0x168] sm:$0xff]
      %v383 = vld [vmem:[%s1 + $0x170] sm:$0xff]
      %v384 = vld [vmem:[%s1 + $0x178] sm:$0xff]
      %v385 = vld [vmem:[%s1 + $0x180] sm:$0xff]
      %v386 = vld [vmem:[%s1 + $0x188] sm:$0xff]
      %v387 = vld [vmem:[%s1 + $0x190] sm:$0xff]
      %v388 = vld [vmem:[%s1 + $0x198] sm:$0xff]
      %v389 = vld [vmem:[%s1 + $0x1a0] sm:$0xff]
      %v390 = vld [vmem:[%s1 + $0x1a8] sm:$0xff]
      %v391 = vld [vmem:[%s1 + $0x1b0] sm:$0xff]
      %v392 = vld [vmem:[%s1 + $0x1b8] sm:$0xff]
      %v393 = vld [vmem:[%s1 + $0x1c0] sm:$0xff]
      %v394 = vld [vmem:[%s1 + $0x1c8] sm:$0xff]
      %v395 = vld [vmem:[%s1 + $0x1d0] sm:$0xff]
      %v396 = vld [vmem:[%s1 + $0x1d8] sm:$0xff]
      %v397 = vld [vmem:[%s1 + $0x1e0] sm:$0xff]
      %v398 = vld [vmem:[%s1 + $0x1e8] sm:$0xff]
      %v399 = vld [vmem:[%s1 + $0x1f0] sm:$0xff]
      %v400 = vld [vmem:[%s1 + $0x1f8] sm:$0xff]
      %v401 = vld [vmem:[%s1 + $0x200] sm:$0xff]
      %v402 = vld [vmem:[%s1 + $0x208] sm:$0xff]
      %v403 = vld [vmem:[%s1 + $0x210] sm:$0xff]
      %v404 = vld [vmem:[%s1 + $0x218] sm:$0xff]
      %v405 = vld [vmem:[%s1 + $0x220] sm:$0xff]
      %v406 = vld [vmem:[%s1 + $0x228] sm:$0xff]
      %v407 = vld [vmem:[%s1 + $0x230] sm:$0xff]
      %v408 = vld [vmem:[%s1 + $0x238] sm:$0xff]
      %v409 = vld [vmem:[%s2] sm:$0x1]
      %v411 = vperm.slane %v409, 0
      %vm413 = vcmask 523264
      %v415 = vsel %vm413, %v181, 0
      %v418 = vsel %vm413, %v186, 0
      %v421 = vsel %vm413, %v191, 0
      %v424 = vsel %vm413, %v196, 0
      %v427 = vsel %vm413, %v201, 0
      %v430 = vsel %vm413, %v206, 0
      %v433 = vsel %vm413, %v211, 0
      %v436 = vsel %vm413, %v216, 0
      %v439 = vsel %vm413, %v221, 0
      %v442 = vsel %vm413, %v226, 0
      %v445 = vsel %vm413, %v231, 0
      %v448 = vsel %vm413, %v236, 0
      %v451 = vsel %vm413, %v241, 0
      %v454 = vsel %vm413, %v246, 0
      %v457 = vsel %vm413, %v251, 0
      %v460 = vsel %vm413, %v256, 0
      %v463 = vsel %vm413, %v261, 0
      %v466 = vsel %vm413, %v266, 0
      %v469 = vsel %vm413, %v271, 0
      %v472 = vsel %vm413, %v276, 0
      %v475 = vsel %vm413, %v281, 0
      %v478 = vsel %vm413, %v286, 0
      %v481 = vsel %vm413, %v291, 0
      %v484 = vsel %vm413, %v296, 0
      %v487 = vsel %vm413, %v301, 0
      %v490 = vsel %vm413, %v306, 0
      %v493 = vsel %vm413, %v311, 0
      %v496 = vsel %vm413, %v316, 0
      %v499 = vsel %vm413, %v321, 0
      %v502 = vsel %vm413, %v326, 0
      %v505 = vsel %vm413, %v331, 0
      %v508 = vsel %vm413, %v336, 0
      %510 = vmatpush.msra.mxu0 %v352
      %511 = vmatpush.msra.mxu0 %v351
      %512 = vmatpush.msra.mxu0 %v350
      %513 = vmatpush.msra.mxu0 %v349
      %514 = vmatpush.msra.mxu0 %v348
      %515 = vmatpush.msra.mxu0 %v347
      %516 = vmatpush.msra.mxu0 %v346
      %517 = vmatpush.msra.mxu0 %v345
      %518 = vmatpush.msra.mxu0 %v344
      %519 = vmatpush.msra.mxu0 %v343
      %520 = vmatpush.msra.mxu0 %v342
      %521 = vmatpush.msra.mxu0 %v341
      %522 = vmatpush.msra.mxu0 %v340
      %523 = vmatpush.msra.mxu0 %v339
      %524 = vmatpush.msra.mxu0 %v338
      %525 = vmatpush.msra.mxu0 %v337
      %526 = vmatmul.f32.gmra.mxu0 %v177
      %v527 = vpop.f32.mrf.mxu0
      %v528 = vadd.f32 %v411, %v527
      %529 = vmatmul.f32.gmra.mxu0 %v182
      %v530 = vpop.f32.mrf.mxu0
      %v531 = vadd.f32 %v411, %v530
      %532 = vmatmul.f32.gmra.mxu0 %v187
      %v533 = vpop.f32.mrf.mxu0
      %v534 = vadd.f32 %v411, %v533
      %535 = vmatmul.f32.gmra.mxu0 %v192
      %v536 = vpop.f32.mrf.mxu0
      %v537 = vadd.f32 %v411, %v536
      %538 = vmatmul.f32.gmra.mxu0 %v197
      %v539 = vpop.f32.mrf.mxu0
      %v540 = vadd.f32 %v411, %v539
      %541 = vmatmul.f32.gmra.mxu0 %v202
      %v542 = vpop.f32.mrf.mxu0
      %v543 = vadd.f32 %v411, %v542
      %544 = vmatmul.f32.gmra.mxu0 %v207
      %v545 = vpop.f32.mrf.mxu0
      %v546 = vadd.f32 %v411, %v545
      %547 = vmatmul.f32.gmra.mxu0 %v212
      %v548 = vpop.f32.mrf.mxu0
      %v549 = vadd.f32 %v411, %v548
      %550 = vmatmul.f32.gmra.mxu0 %v217
      %v551 = vpop.f32.mrf.mxu0
      %v552 = vadd.f32 %v411, %v551
      %553 = vmatmul.f32.gmra.mxu0 %v222
      %v554 = vpop.f32.mrf.mxu0
      %v555 = vadd.f32 %v411, %v554
      %556 = vmatmul.f32.gmra.mxu0 %v227
      %v557 = vpop.f32.mrf.mxu0
      %v558 = vadd.f32 %v411, %v557
      %559 = vmatmul.f32.gmra.mxu0 %v232
      %v560 = vpop.f32.mrf.mxu0
      %v561 = vadd.f32 %v411, %v560
      %562 = vmatmul.f32.gmra.mxu0 %v237
      %v563 = vpop.f32.mrf.mxu0
      %v564 = vadd.f32 %v411, %v563
      %565 = vmatmul.f32.gmra.mxu0 %v242
      %v566 = vpop.f32.mrf.mxu0
      %v567 = vadd.f32 %v411, %v566
      %568 = vmatmul.f32.gmra.mxu0 %v247
      %v569 = vpop.f32.mrf.mxu0
      %v570 = vadd.f32 %v411, %v569
      %571 = vmatmul.f32.gmra.mxu0 %v252
      %v572 = vpop.f32.mrf.mxu0
      %v573 = vadd.f32 %v411, %v572
      %574 = vmatmul.f32.gmra.mxu0 %v257
      %v575 = vpop.f32.mrf.mxu0
      %v576 = vadd.f32 %v411, %v575
      %577 = vmatmul.f32.gmra.mxu0 %v262
      %v578 = vpop.f32.mrf.mxu0
      %v579 = vadd.f32 %v411, %v578
      %580 = vmatmul.f32.gmra.mxu0 %v267
      %v581 = vpop.f32.mrf.mxu0
      %v582 = vadd.f32 %v411, %v581
      %583 = vmatmul.f32.gmra.mxu0 %v272
      %v584 = vpop.f32.mrf.mxu0
      %v585 = vadd.f32 %v411, %v584
      %586 = vmatmul.f32.gmra.mxu0 %v277
      %v587 = vpop.f32.mrf.mxu0
      %v588 = vadd.f32 %v411, %v587
      %589 = vmatmul.f32.gmra.mxu0 %v282
      %v590 = vpop.f32.mrf.mxu0
      %v591 = vadd.f32 %v411, %v590
      %592 = vmatmul.f32.gmra.mxu0 %v287
      %v593 = vpop.f32.mrf.mxu0
      %v594 = vadd.f32 %v411, %v593
      %595 = vmatmul.f32.gmra.mxu0 %v292
      %v596 = vpop.f32.mrf.mxu0
      %v597 = vadd.f32 %v411, %v596
      %598 = vmatmul.f32.gmra.mxu0 %v297
      %v599 = vpop.f32.mrf.mxu0
      %v600 = vadd.f32 %v411, %v599
      %601 = vmatmul.f32.gmra.mxu0 %v302
      %v602 = vpop.f32.mrf.mxu0
      %v603 = vadd.f32 %v411, %v602
      %604 = vmatmul.f32.gmra.mxu0 %v307
      %v605 = vpop.f32.mrf.mxu0
      %v606 = vadd.f32 %v411, %v605
      %607 = vmatmul.f32.gmra.mxu0 %v312
      %v608 = vpop.f32.mrf.mxu0
      %v609 = vadd.f32 %v411, %v608
      %610 = vmatmul.f32.gmra.mxu0 %v317
      %v611 = vpop.f32.mrf.mxu0
      %v612 = vadd.f32 %v411, %v611
      %613 = vmatmul.f32.gmra.mxu0 %v322
      %v614 = vpop.f32.mrf.mxu0
      %v615 = vadd.f32 %v411, %v614
      %616 = vmatmul.f32.gmra.mxu0 %v327
      %v617 = vpop.f32.mrf.mxu0
      %v618 = vadd.f32 %v411, %v617
      %619 = vmatmul.f32.gmra.mxu0 %v332
      %v620 = vpop.f32.mrf.mxu0
      %v621 = vadd.f32 %v411, %v620
      %622 = vdwg.mxu0
      %623 = vmatpush.msra.mxu0 %v368
      %624 = vmatpush.msra.mxu0 %v367
      %625 = vmatpush.msra.mxu0 %v366
      %626 = vmatpush.msra.mxu0 %v365
      %627 = vmatpush.msra.mxu0 %v364
      %628 = vmatpush.msra.mxu0 %v363
      %629 = vmatpush.msra.mxu0 %v362
      %630 = vmatpush.msra.mxu0 %v361
      %631 = vmatpush.msra.mxu0 %v360
      %632 = vmatpush.msra.mxu0 %v359
      %633 = vmatpush.msra.mxu0 %v358
      %634 = vmatpush.msra.mxu0 %v357
      %635 = vmatpush.msra.mxu0 %v356
      %636 = vmatpush.msra.mxu0 %v355
      %637 = vmatpush.msra.mxu0 %v354
      %638 = vmatpush.msra.mxu0 %v353
      %639 = vmatmul.f32.gmra.mxu0 %v178
      %v640 = vpop.f32.mrf.mxu0
      %v641 = vadd.f32 %v528, %v640
      %642 = vmatmul.f32.gmra.mxu0 %v183
      %v643 = vpop.f32.mrf.mxu0
      %v644 = vadd.f32 %v531, %v643
      %645 = vmatmul.f32.gmra.mxu0 %v188
      %v646 = vpop.f32.mrf.mxu0
      %v647 = vadd.f32 %v534, %v646
      %648 = vmatmul.f32.gmra.mxu0 %v193
      %v649 = vpop.f32.mrf.mxu0
      %v650 = vadd.f32 %v537, %v649
      %651 = vmatmul.f32.gmra.mxu0 %v198
      %v652 = vpop.f32.mrf.mxu0
      %v653 = vadd.f32 %v540, %v652
      %654 = vmatmul.f32.gmra.mxu0 %v203
      %v655 = vpop.f32.mrf.mxu0
      %v656 = vadd.f32 %v543, %v655
      %657 = vmatmul.f32.gmra.mxu0 %v208
      %v658 = vpop.f32.mrf.mxu0
      %v659 = vadd.f32 %v546, %v658
      %660 = vmatmul.f32.gmra.mxu0 %v213
      %v661 = vpop.f32.mrf.mxu0
      %v662 = vadd.f32 %v549, %v661
      %663 = vmatmul.f32.gmra.mxu0 %v218
      %v664 = vpop.f32.mrf.mxu0
      %v665 = vadd.f32 %v552, %v664
      %666 = vmatmul.f32.gmra.mxu0 %v223
      %v667 = vpop.f32.mrf.mxu0
      %v668 = vadd.f32 %v555, %v667
      %669 = vmatmul.f32.gmra.mxu0 %v228
      %v670 = vpop.f32.mrf.mxu0
      %v671 = vadd.f32 %v558, %v670
      %672 = vmatmul.f32.gmra.mxu0 %v233
      %v673 = vpop.f32.mrf.mxu0
      %v674 = vadd.f32 %v561, %v673
      %675 = vmatmul.f32.gmra.mxu0 %v238
      %v676 = vpop.f32.mrf.mxu0
      %v677 = vadd.f32 %v564, %v676
      %678 = vmatmul.f32.gmra.mxu0 %v243
      %v679 = vpop.f32.mrf.mxu0
      %v680 = vadd.f32 %v567, %v679
      %681 = vmatmul.f32.gmra.mxu0 %v248
      %v682 = vpop.f32.mrf.mxu0
      %v683 = vadd.f32 %v570, %v682
      %684 = vmatmul.f32.gmra.mxu0 %v253
      %v685 = vpop.f32.mrf.mxu0
      %v686 = vadd.f32 %v573, %v685
      %687 = vmatmul.f32.gmra.mxu0 %v258
      %v688 = vpop.f32.mrf.mxu0
      %v689 = vadd.f32 %v576, %v688
      %690 = vmatmul.f32.gmra.mxu0 %v263
      %v691 = vpop.f32.mrf.mxu0
      %v692 = vadd.f32 %v579, %v691
      %693 = vmatmul.f32.gmra.mxu0 %v268
      %v694 = vpop.f32.mrf.mxu0
      %v695 = vadd.f32 %v582, %v694
      %696 = vmatmul.f32.gmra.mxu0 %v273
      %v697 = vpop.f32.mrf.mxu0
      %v698 = vadd.f32 %v585, %v697
      %699 = vmatmul.f32.gmra.mxu0 %v278
      %v700 = vpop.f32.mrf.mxu0
      %v701 = vadd.f32 %v588, %v700
      %702 = vmatmul.f32.gmra.mxu0 %v283
      %v703 = vpop.f32.mrf.mxu0
      %v704 = vadd.f32 %v591, %v703
      %705 = vmatmul.f32.gmra.mxu0 %v288
      %v706 = vpop.f32.mrf.mxu0
      %v707 = vadd.f32 %v594, %v706
      %708 = vmatmul.f32.gmra.mxu0 %v293
      %v709 = vpop.f32.mrf.mxu0
      %v710 = vadd.f32 %v597, %v709
      %711 = vmatmul.f32.gmra.mxu0 %v298
      %v712 = vpop.f32.mrf.mxu0
      %v713 = vadd.f32 %v600, %v712
      %714 = vmatmul.f32.gmra.mxu0 %v303
      %v715 = vpop.f32.mrf.mxu0
      %v716 = vadd.f32 %v603, %v715
      %717 = vmatmul.f32.gmra.mxu0 %v308
      %v718 = vpop.f32.mrf.mxu0
      %v719 = vadd.f32 %v606, %v718
      %720 = vmatmul.f32.gmra.mxu0 %v313
      %v721 = vpop.f32.mrf.mxu0
      %v722 = vadd.f32 %v609, %v721
      %723 = vmatmul.f32.gmra.mxu0 %v318
      %v724 = vpop.f32.mrf.mxu0
      %v725 = vadd.f32 %v612, %v724
      %726 = vmatmul.f32.gmra.mxu0 %v323
      %v727 = vpop.f32.mrf.mxu0
      %v728 = vadd.f32 %v615, %v727
      %729 = vmatmul.f32.gmra.mxu0 %v328
      %v730 = vpop.f32.mrf.mxu0
      %v731 = vadd.f32 %v618, %v730
      %732 = vmatmul.f32.gmra.mxu0 %v333
      %v733 = vpop.f32.mrf.mxu0
      %v734 = vadd.f32 %v621, %v733
      %735 = vdwg.mxu0
      %736 = vmatpush.msra.mxu0 %v384
      %737 = vmatpush.msra.mxu0 %v383
      %738 = vmatpush.msra.mxu0 %v382
      %739 = vmatpush.msra.mxu0 %v381
      %740 = vmatpush.msra.mxu0 %v380
      %741 = vmatpush.msra.mxu0 %v379
      %742 = vmatpush.msra.mxu0 %v378
      %743 = vmatpush.msra.mxu0 %v377
      %744 = vmatpush.msra.mxu0 %v376
      %745 = vmatpush.msra.mxu0 %v375
      %746 = vmatpush.msra.mxu0 %v374
      %747 = vmatpush.msra.mxu0 %v373
      %748 = vmatpush.msra.mxu0 %v372
      %749 = vmatpush.msra.mxu0 %v371
      %750 = vmatpush.msra.mxu0 %v370
      %751 = vmatpush.msra.mxu0 %v369
      %752 = vmatmul.f32.gmra.mxu0 %v179
      %v753 = vpop.f32.mrf.mxu0
      %v754 = vadd.f32 %v641, %v753
      %755 = vmatmul.f32.gmra.mxu0 %v184
      %v756 = vpop.f32.mrf.mxu0
      %v757 = vadd.f32 %v644, %v756
      %758 = vmatmul.f32.gmra.mxu0 %v189
      %v759 = vpop.f32.mrf.mxu0
      %v760 = vadd.f32 %v647, %v759
      %761 = vmatmul.f32.gmra.mxu0 %v194
      %v762 = vpop.f32.mrf.mxu0
      %v763 = vadd.f32 %v650, %v762
      %764 = vmatmul.f32.gmra.mxu0 %v199
      %v765 = vpop.f32.mrf.mxu0
      %v766 = vadd.f32 %v653, %v765
      %767 = vmatmul.f32.gmra.mxu0 %v204
      %v768 = vpop.f32.mrf.mxu0
      %v769 = vadd.f32 %v656, %v768
      %770 = vmatmul.f32.gmra.mxu0 %v209
      %v771 = vpop.f32.mrf.mxu0
      %v772 = vadd.f32 %v659, %v771
      %773 = vmatmul.f32.gmra.mxu0 %v214
      %v774 = vpop.f32.mrf.mxu0
      %v775 = vadd.f32 %v662, %v774
      %776 = vmatmul.f32.gmra.mxu0 %v219
      %v777 = vpop.f32.mrf.mxu0
      %v778 = vadd.f32 %v665, %v777
      %779 = vmatmul.f32.gmra.mxu0 %v224
      %v780 = vpop.f32.mrf.mxu0
      %v781 = vadd.f32 %v668, %v780
      %782 = vmatmul.f32.gmra.mxu0 %v229
      %v783 = vpop.f32.mrf.mxu0
      %v784 = vadd.f32 %v671, %v783
      %785 = vmatmul.f32.gmra.mxu0 %v234
      %v786 = vpop.f32.mrf.mxu0
      %v787 = vadd.f32 %v674, %v786
      %788 = vmatmul.f32.gmra.mxu0 %v239
      %v789 = vpop.f32.mrf.mxu0
      %v790 = vadd.f32 %v677, %v789
      %791 = vmatmul.f32.gmra.mxu0 %v244
      %v792 = vpop.f32.mrf.mxu0
      %v793 = vadd.f32 %v680, %v792
      %794 = vmatmul.f32.gmra.mxu0 %v249
      %v795 = vpop.f32.mrf.mxu0
      %v796 = vadd.f32 %v683, %v795
      %797 = vmatmul.f32.gmra.mxu0 %v254
      %v798 = vpop.f32.mrf.mxu0
      %v799 = vadd.f32 %v686, %v798
      %800 = vmatmul.f32.gmra.mxu0 %v259
      %v801 = vpop.f32.mrf.mxu0
      %v802 = vadd.f32 %v689, %v801
      %803 = vmatmul.f32.gmra.mxu0 %v264
      %v804 = vpop.f32.mrf.mxu0
      %v805 = vadd.f32 %v692, %v804
      %806 = vmatmul.f32.gmra.mxu0 %v269
      %v807 = vpop.f32.mrf.mxu0
      %v808 = vadd.f32 %v695, %v807
      %809 = vmatmul.f32.gmra.mxu0 %v274
      %v810 = vpop.f32.mrf.mxu0
      %v811 = vadd.f32 %v698, %v810
      %812 = vmatmul.f32.gmra.mxu0 %v279
      %v813 = vpop.f32.mrf.mxu0
      %v814 = vadd.f32 %v701, %v813
      %815 = vmatmul.f32.gmra.mxu0 %v284
      %v816 = vpop.f32.mrf.mxu0
      %v817 = vadd.f32 %v704, %v816
      %818 = vmatmul.f32.gmra.mxu0 %v289
      %v819 = vpop.f32.mrf.mxu0
      %v820 = vadd.f32 %v707, %v819
      %821 = vmatmul.f32.gmra.mxu0 %v294
      %v822 = vpop.f32.mrf.mxu0
      %v823 = vadd.f32 %v710, %v822
      %824 = vmatmul.f32.gmra.mxu0 %v299
      %v825 = vpop.f32.mrf.mxu0
      %v826 = vadd.f32 %v713, %v825
      %827 = vmatmul.f32.gmra.mxu0 %v304
      %v828 = vpop.f32.mrf.mxu0
      %v829 = vadd.f32 %v716, %v828
      %830 = vmatmul.f32.gmra.mxu0 %v309
      %v831 = vpop.f32.mrf.mxu0
      %v832 = vadd.f32 %v719, %v831
      %833 = vmatmul.f32.gmra.mxu0 %v314
      %v834 = vpop.f32.mrf.mxu0
      %v835 = vadd.f32 %v722, %v834
      %836 = vmatmul.f32.gmra.mxu0 %v319
      %v837 = vpop.f32.mrf.mxu0
      %v838 = vadd.f32 %v725, %v837
      %839 = vmatmul.f32.gmra.mxu0 %v324
      %v840 = vpop.f32.mrf.mxu0
      %v841 = vadd.f32 %v728, %v840
      %842 = vmatmul.f32.gmra.mxu0 %v329
      %v843 = vpop.f32.mrf.mxu0
      %v844 = vadd.f32 %v731, %v843
      %845 = vmatmul.f32.gmra.mxu0 %v334
      %v846 = vpop.f32.mrf.mxu0
      %v847 = vadd.f32 %v734, %v846
      %848 = vdwg.mxu0
      %849 = vmatpush.msra.mxu0 %v400
      %850 = vmatpush.msra.mxu0 %v399
      %851 = vmatpush.msra.mxu0 %v398
      %852 = vmatpush.msra.mxu0 %v397
      %853 = vmatpush.msra.mxu0 %v396
      %854 = vmatpush.msra.mxu0 %v395
      %855 = vmatpush.msra.mxu0 %v394
      %856 = vmatpush.msra.mxu0 %v393
      %857 = vmatpush.msra.mxu0 %v392
      %858 = vmatpush.msra.mxu0 %v391
      %859 = vmatpush.msra.mxu0 %v390
      %860 = vmatpush.msra.mxu0 %v389
      %861 = vmatpush.msra.mxu0 %v388
      %862 = vmatpush.msra.mxu0 %v387
      %863 = vmatpush.msra.mxu0 %v386
      %864 = vmatpush.msra.mxu0 %v385
      %865 = vmatmul.f32.gmra.mxu0 %v180
      %v866 = vpop.f32.mrf.mxu0
      %v867 = vadd.f32 %v754, %v866
      %868 = vmatmul.f32.gmra.mxu0 %v185
      %v869 = vpop.f32.mrf.mxu0
      %v870 = vadd.f32 %v757, %v869
      %871 = vmatmul.f32.gmra.mxu0 %v190
      %v872 = vpop.f32.mrf.mxu0
      %v873 = vadd.f32 %v760, %v872
      %874 = vmatmul.f32.gmra.mxu0 %v195
      %v875 = vpop.f32.mrf.mxu0
      %v876 = vadd.f32 %v763, %v875
      %877 = vmatmul.f32.gmra.mxu0 %v200
      %v878 = vpop.f32.mrf.mxu0
      %v879 = vadd.f32 %v766, %v878
      %880 = vmatmul.f32.gmra.mxu0 %v205
      %v881 = vpop.f32.mrf.mxu0
      %v882 = vadd.f32 %v769, %v881
      %883 = vmatmul.f32.gmra.mxu0 %v210
      %v884 = vpop.f32.mrf.mxu0
      %v885 = vadd.f32 %v772, %v884
      %886 = vmatmul.f32.gmra.mxu0 %v215
      %v887 = vpop.f32.mrf.mxu0
      %v888 = vadd.f32 %v775, %v887
      %889 = vmatmul.f32.gmra.mxu0 %v220
      %v890 = vpop.f32.mrf.mxu0
      %v891 = vadd.f32 %v778, %v890
      %892 = vmatmul.f32.gmra.mxu0 %v225
      %v893 = vpop.f32.mrf.mxu0
      %v894 = vadd.f32 %v781, %v893
      %895 = vmatmul.f32.gmra.mxu0 %v230
      %v896 = vpop.f32.mrf.mxu0
      %v897 = vadd.f32 %v784, %v896
      %898 = vmatmul.f32.gmra.mxu0 %v235
      %v899 = vpop.f32.mrf.mxu0
      %v900 = vadd.f32 %v787, %v899
      %901 = vmatmul.f32.gmra.mxu0 %v240
      %v902 = vpop.f32.mrf.mxu0
      %v903 = vadd.f32 %v790, %v902
      %904 = vmatmul.f32.gmra.mxu0 %v245
      %v905 = vpop.f32.mrf.mxu0
      %v906 = vadd.f32 %v793, %v905
      %907 = vmatmul.f32.gmra.mxu0 %v250
      %v908 = vpop.f32.mrf.mxu0
      %v909 = vadd.f32 %v796, %v908
      %910 = vmatmul.f32.gmra.mxu0 %v255
      %v911 = vpop.f32.mrf.mxu0
      %v912 = vadd.f32 %v799, %v911
      %913 = vmatmul.f32.gmra.mxu0 %v260
      %v914 = vpop.f32.mrf.mxu0
      %v915 = vadd.f32 %v802, %v914
      %916 = vmatmul.f32.gmra.mxu0 %v265
      %v917 = vpop.f32.mrf.mxu0
      %v918 = vadd.f32 %v805, %v917
      %919 = vmatmul.f32.gmra.mxu0 %v270
      %v920 = vpop.f32.mrf.mxu0
      %v921 = vadd.f32 %v808, %v920
      %922 = vmatmul.f32.gmra.mxu0 %v275
      %v923 = vpop.f32.mrf.mxu0
      %v924 = vadd.f32 %v811, %v923
      %925 = vmatmul.f32.gmra.mxu0 %v280
      %v926 = vpop.f32.mrf.mxu0
      %v927 = vadd.f32 %v814, %v926
      %928 = vmatmul.f32.gmra.mxu0 %v285
      %v929 = vpop.f32.mrf.mxu0
      %v930 = vadd.f32 %v817, %v929
      %931 = vmatmul.f32.gmra.mxu0 %v290
      %v932 = vpop.f32.mrf.mxu0
      %v933 = vadd.f32 %v820, %v932
      %934 = vmatmul.f32.gmra.mxu0 %v295
      %v935 = vpop.f32.mrf.mxu0
      %v936 = vadd.f32 %v823, %v935
      %937 = vmatmul.f32.gmra.mxu0 %v300
      %v938 = vpop.f32.mrf.mxu0
      %v939 = vadd.f32 %v826, %v938
      %940 = vmatmul.f32.gmra.mxu0 %v305
      %v941 = vpop.f32.mrf.mxu0
      %v942 = vadd.f32 %v829, %v941
      %943 = vmatmul.f32.gmra.mxu0 %v310
      %v944 = vpop.f32.mrf.mxu0
      %v945 = vadd.f32 %v832, %v944
      %946 = vmatmul.f32.gmra.mxu0 %v315
      %v947 = vpop.f32.mrf.mxu0
      %v948 = vadd.f32 %v835, %v947
      %949 = vmatmul.f32.gmra.mxu0 %v320
      %v950 = vpop.f32.mrf.mxu0
      %v951 = vadd.f32 %v838, %v950
      %952 = vmatmul.f32.gmra.mxu0 %v325
      %v953 = vpop.f32.mrf.mxu0
      %v954 = vadd.f32 %v841, %v953
      %955 = vmatmul.f32.gmra.mxu0 %v330
      %v956 = vpop.f32.mrf.mxu0
      %v957 = vadd.f32 %v844, %v956
      %958 = vmatmul.f32.gmra.mxu0 %v335
      %v959 = vpop.f32.mrf.mxu0
      %v960 = vadd.f32 %v847, %v959
      %961 = vdwg.mxu0
      %962 = vmatpush.msra.mxu0 0.0
      %963 = vmatpush.msra.mxu0 0.0
      %964 = vmatpush.msra.mxu0 0.0
      %965 = vmatpush.msra.mxu0 0.0
      %966 = vmatpush.msra.mxu0 0.0
      %967 = vmatpush.msra.mxu0 0.0
      %968 = vmatpush.msra.mxu0 0.0
      %969 = vmatpush.msra.mxu0 0.0
      %970 = vmatpush.msra.mxu0 %v408
      %971 = vmatpush.msra.mxu0 %v407
      %972 = vmatpush.msra.mxu0 %v406
      %973 = vmatpush.msra.mxu0 %v405
      %974 = vmatpush.msra.mxu0 %v404
      %975 = vmatpush.msra.mxu0 %v403
      %976 = vmatpush.msra.mxu0 %v402
      %977 = vmatpush.msra.mxu0 %v401
      %978 = vmatmul.f32.gmra.mxu0 %v415
      %v979 = vpop.f32.mrf.mxu0
      %v980 = vadd.f32 %v867, %v979
      %981 = vmatmul.f32.gmra.mxu0 %v418
      %v982 = vpop.f32.mrf.mxu0
      %v983 = vadd.f32 %v870, %v982
      %984 = vmatmul.f32.gmra.mxu0 %v421
      %v985 = vpop.f32.mrf.mxu0
      %v986 = vadd.f32 %v873, %v985
      %987 = vmatmul.f32.gmra.mxu0 %v424
      %v988 = vpop.f32.mrf.mxu0
      %v989 = vadd.f32 %v876, %v988
      %990 = vmatmul.f32.gmra.mxu0 %v427
      %v991 = vpop.f32.mrf.mxu0
      %v992 = vadd.f32 %v879, %v991
      %993 = vmatmul.f32.gmra.mxu0 %v430
      %v994 = vpop.f32.mrf.mxu0
      %v995 = vadd.f32 %v882, %v994
      %996 = vmatmul.f32.gmra.mxu0 %v433
      %v997 = vpop.f32.mrf.mxu0
      %v998 = vadd.f32 %v885, %v997
      %999 = vmatmul.f32.gmra.mxu0 %v436
      %v1000 = vpop.f32.mrf.mxu0
      %v1001 = vadd.f32 %v888, %v1000
      %1002 = vmatmul.f32.gmra.mxu0 %v439
      %v1003 = vpop.f32.mrf.mxu0
      %v1004 = vadd.f32 %v891, %v1003
      %1005 = vmatmul.f32.gmra.mxu0 %v442
      %v1006 = vpop.f32.mrf.mxu0
      %v1007 = vadd.f32 %v894, %v1006
      %1008 = vmatmul.f32.gmra.mxu0 %v445
      %v1009 = vpop.f32.mrf.mxu0
      %v1010 = vadd.f32 %v897, %v1009
      %1011 = vmatmul.f32.gmra.mxu0 %v448
      %v1012 = vpop.f32.mrf.mxu0
      %v1013 = vadd.f32 %v900, %v1012
      %1014 = vmatmul.f32.gmra.mxu0 %v451
      %v1015 = vpop.f32.mrf.mxu0
      %v1016 = vadd.f32 %v903, %v1015
      %1017 = vmatmul.f32.gmra.mxu0 %v454
      %v1018 = vpop.f32.mrf.mxu0
      %v1019 = vadd.f32 %v906, %v1018
      %1020 = vmatmul.f32.gmra.mxu0 %v457
      %v1021 = vpop.f32.mrf.mxu0
      %v1022 = vadd.f32 %v909, %v1021
      %1023 = vmatmul.f32.gmra.mxu0 %v460
      %v1024 = vpop.f32.mrf.mxu0
      %v1025 = vadd.f32 %v912, %v1024
      %1026 = vmatmul.f32.gmra.mxu0 %v463
      %v1027 = vpop.f32.mrf.mxu0
      %v1028 = vadd.f32 %v915, %v1027
      %1029 = vmatmul.f32.gmra.mxu0 %v466
      %v1030 = vpop.f32.mrf.mxu0
      %v1031 = vadd.f32 %v918, %v1030
      %1032 = vmatmul.f32.gmra.mxu0 %v469
      %v1033 = vpop.f32.mrf.mxu0
      %v1034 = vadd.f32 %v921, %v1033
      %1035 = vmatmul.f32.gmra.mxu0 %v472
      %v1036 = vpop.f32.mrf.mxu0
      %v1037 = vadd.f32 %v924, %v1036
      %1038 = vmatmul.f32.gmra.mxu0 %v475
      %v1039 = vpop.f32.mrf.mxu0
      %v1040 = vadd.f32 %v927, %v1039
      %1041 = vmatmul.f32.gmra.mxu0 %v478
      %v1042 = vpop.f32.mrf.mxu0
      %v1043 = vadd.f32 %v930, %v1042
      %1044 = vmatmul.f32.gmra.mxu0 %v481
      %v1045 = vpop.f32.mrf.mxu0
      %v1046 = vadd.f32 %v933, %v1045
      %1047 = vmatmul.f32.gmra.mxu0 %v484
      %v1048 = vpop.f32.mrf.mxu0
      %v1049 = vadd.f32 %v936, %v1048
      %1050 = vmatmul.f32.gmra.mxu0 %v487
      %v1051 = vpop.f32.mrf.mxu0
      %v1052 = vadd.f32 %v939, %v1051
      %1053 = vmatmul.f32.gmra.mxu0 %v490
      %v1054 = vpop.f32.mrf.mxu0
      %v1055 = vadd.f32 %v942, %v1054
      %1056 = vmatmul.f32.gmra.mxu0 %v493
      %v1057 = vpop.f32.mrf.mxu0
      %v1058 = vadd.f32 %v945, %v1057
      %1059 = vmatmul.f32.gmra.mxu0 %v496
      %v1060 = vpop.f32.mrf.mxu0
      %v1061 = vadd.f32 %v948, %v1060
      %1062 = vmatmul.f32.gmra.mxu0 %v499
      %v1063 = vpop.f32.mrf.mxu0
      %v1064 = vadd.f32 %v951, %v1063
      %1065 = vmatmul.f32.gmra.mxu0 %v502
      %v1066 = vpop.f32.mrf.mxu0
      %v1067 = vadd.f32 %v954, %v1066
      %1068 = vmatmul.f32.gmra.mxu0 %v505
      %v1069 = vpop.f32.mrf.mxu0
      %v1070 = vadd.f32 %v957, %v1069
      %1071 = vmatmul.f32.gmra.mxu0 %v508
      %v1072 = vpop.f32.mrf.mxu0
      %v1073 = vadd.f32 %v960, %v1072
      %1074 = vdwg.mxu0
      %vm1075 = vcmask 72704
      %1076 = vst.msk [vmem:[%s175] sm:$0xff] %vm1075, %v980
      %1077 = vst.msk [vmem:[%s175 + $0x8] sm:$0xff] %vm1075, %v983
      %1078 = vst.msk [vmem:[%s175 + $0x10] sm:$0xff] %vm1075, %v986
      %1079 = vst.msk [vmem:[%s175 + $0x18] sm:$0xff] %vm1075, %v989
      %1080 = vst.msk [vmem:[%s175 + $0x20] sm:$0xff] %vm1075, %v992
      %1081 = vst.msk [vmem:[%s175 + $0x28] sm:$0xff] %vm1075, %v995
      %1082 = vst.msk [vmem:[%s175 + $0x30] sm:$0xff] %vm1075, %v998
      %1083 = vst.msk [vmem:[%s175 + $0x38] sm:$0xff] %vm1075, %v1001
      %1084 = vst.msk [vmem:[%s175 + $0x40] sm:$0xff] %vm1075, %v1004
      %1085 = vst.msk [vmem:[%s175 + $0x48] sm:$0xff] %vm1075, %v1007
      %1086 = vst.msk [vmem:[%s175 + $0x50] sm:$0xff] %vm1075, %v1010
      %1087 = vst.msk [vmem:[%s175 + $0x58] sm:$0xff] %vm1075, %v1013
      %1088 = vst.msk [vmem:[%s175 + $0x60] sm:$0xff] %vm1075, %v1016
      %1089 = vst.msk [vmem:[%s175 + $0x68] sm:$0xff] %vm1075, %v1019
      %1090 = vst.msk [vmem:[%s175 + $0x70] sm:$0xff] %vm1075, %v1022
      %1091 = vst.msk [vmem:[%s175 + $0x78] sm:$0xff] %vm1075, %v1025
      %1092 = vst.msk [vmem:[%s175 + $0x80] sm:$0xff] %vm1075, %v1028
      %1093 = vst.msk [vmem:[%s175 + $0x88] sm:$0xff] %vm1075, %v1031
      %1094 = vst.msk [vmem:[%s175 + $0x90] sm:$0xff] %vm1075, %v1034
      %1095 = vst.msk [vmem:[%s175 + $0x98] sm:$0xff] %vm1075, %v1037
      %1096 = vst.msk [vmem:[%s175 + $0xa0] sm:$0xff] %vm1075, %v1040
      %1097 = vst.msk [vmem:[%s175 + $0xa8] sm:$0xff] %vm1075, %v1043
      %1098 = vst.msk [vmem:[%s175 + $0xb0] sm:$0xff] %vm1075, %v1046
      %1099 = vst.msk [vmem:[%s175 + $0xb8] sm:$0xff] %vm1075, %v1049
      %1100 = vst.msk [vmem:[%s175 + $0xc0] sm:$0xff] %vm1075, %v1052
      %1101 = vst.msk [vmem:[%s175 + $0xc8] sm:$0xff] %vm1075, %v1055
      %1102 = vst.msk [vmem:[%s175 + $0xd0] sm:$0xff] %vm1075, %v1058
      %1103 = vst.msk [vmem:[%s175 + $0xd8] sm:$0xff] %vm1075, %v1061
      %1104 = vst.msk [vmem:[%s175 + $0xe0] sm:$0xff] %vm1075, %v1064
      %1105 = vst.msk [vmem:[%s175 + $0xe8] sm:$0xff] %vm1075, %v1067
      %1106 = vst.msk [vmem:[%s175 + $0xf0] sm:$0xff] %vm1075, %v1070
      %1107 = vst.msk [vmem:[%s175 + $0xf8] sm:$0xff] %vm1075, %v1073
      %s1108 = smul.u32 32, %s14
      %p1109 = scmp.lt.s32.totalorder %s1108, 63
      %s1110 = scalar_select %p1109, %s1108, 63
      %s1111 = smul.addr %s1110, 8
      %s1112 = scalar_lea.vmem %s3, %s1111
      // Predicated region
      $region33: #{tpu_custom_call.1} parent=31 // pred_check
        %p1113 = pneg %p100
      $region34: #{tpu_custom_call.1} parent=31 // pred_check_branch
        %1115 = sbr.rel (%p1113) target = $region36
      $region35: #{tpu_custom_call.1} parent=31 // pred_region
        %s1116 = smul.u32 32, %s14
      $region36: #{tpu_custom_call.1} parent=31 // pred_fallthru
        _
    $region32: #{tpu_custom_call.1} parent=5 // pred_fallthru
      _
    %p1117 = scmp.le.s32.totalorder 2, %s9
    // Predicated region
    $region37: #{tpu_custom_call.1} parent=5 // pred_check
      %p1118 = pneg %p1117
    $region38: #{tpu_custom_call.1} parent=5 // pred_check_branch
      %1120 = sbr.rel (%p1118) target = $region40
    $region39: #{tpu_custom_call.1} parent=5 // pred_region
      %s1121 = ssub.s32 %s9, 2
      // Predicated region
      $region41: #{tpu_custom_call.1} parent=39 // pred_check
        %p1122 = pneg %p106
      $region42: #{tpu_custom_call.1} parent=39 // pred_check_branch
        %1124 = sbr.rel (%p1122) target = $region44
      $region43: #{tpu_custom_call.1} parent=39 // pred_region
        %s1125 = smul.u32 32, %s15
        %p1126 = scmp.lt.s32.totalorder %s1125, 63
        %s1127 = scalar_select %p1126, %s1125, 63
        %s1128 = smul.addr %s1127, 8
        %s1129 = scalar_lea.vmem %s3, %s1128
      $region44: #{tpu_custom_call.1} parent=39 // pred_fallthru
        _
    $region40: #{tpu_custom_call.1} parent=5 // pred_fallthru
      _
  $region6: #{tpu_custom_call.1} parent=0 // loop_footer
    %s13 = sadd.s32 1, %s9
  $region7: #{tpu_custom_call.1} parent=0 // loop_footer_branch
    %8 = sbr.rel target = $region3
  $region8: #{tpu_custom_call.1} parent=0 // loop_exit
    _

</llo_original>
